<compile_context>
chip_gen: v7x
topology: tpu7x:2x2x1
jax: 0.10.0
libtpu: 0.0.40
codegen_flags: <defaults>
</compile_context>

<pallas_src>
import functools

import jax
import jax.numpy as jnp
from jax import lax
from jax.experimental import pallas as pl
from jax.experimental.pallas import tpu as pltpu


def _adain_kernel(x_ref, m_ref, o_ref, *, eps, unbiased, alpha, hw_valid):
    # x_ref / m_ref / o_ref: (row_tile, hw_pad) tiles in VMEM.
    x = x_ref[...].astype(jnp.float32)
    m = m_ref[...].astype(jnp.float32)

    hw_pad = x.shape[-1]
    inv_n = jnp.float32(1.0 / hw_valid)
    denom = (hw_valid - 1) if unbiased else hw_valid
    inv_denom = jnp.float32(1.0 / denom) if denom > 0 else jnp.float32(jnp.nan)

    if hw_pad != hw_valid:
        lane = lax.broadcasted_iota(jnp.int32, x.shape, dimension=x.ndim - 1)
        valid = lane < hw_valid
        x = jnp.where(valid, x, 0.0)
        m = jnp.where(valid, m, 0.0)
    else:
        valid = None

    # --- Style branch first (ends m's live range before content temporaries). ---
    mu_s = jnp.sum(m, axis=-1, keepdims=True) * inv_n
    mc = m - mu_s
    if valid is not None:
        mc = jnp.where(valid, mc, 0.0)
    var_s = jnp.sum(mc * mc, axis=-1, keepdims=True) * inv_denom
    gamma = jnp.sqrt(var_s + eps)

    # --- Content (instance-norm) branch. ---
    mu_c = jnp.sum(x, axis=-1, keepdims=True) * inv_n
    xc = x - mu_c
    if valid is not None:
        xc = jnp.where(valid, xc, 0.0)
    var_c = jnp.sum(xc * xc, axis=-1, keepdims=True) * inv_denom

    # Fold gamma * rsqrt(var_c + eps) into a single per-row scale.
    scale = gamma * lax.rsqrt(var_c + eps)
    out = xc * scale + mu_s
    if alpha != 1.0:
        out = jnp.float32(alpha) * out + jnp.float32(1.0 - alpha) * x
    o_ref[...] = out.astype(o_ref.dtype)


def adaptive_norm(x, modulation, *, eps=1e-9, unbiased=True, alpha=1.0):
    """AdaIN forward. x, modulation: NCHW arrays of identical shape."""
    assert x.shape == modulation.shape and x.ndim == 4
    n, c, h, w = x.shape
    rows, hw = n * c, h * w

    x2 = x.reshape(rows, hw)
    m2 = modulation.reshape(rows, hw)

    # Keep the lane axis dense: pad H*W up to a multiple of 128; padded lanes
    # are masked out of the in-kernel statistics and sliced off afterwards.
    hw_pad = ((hw + 127) // 128) * 128
    if hw_pad != hw:
        pad = ((0, 0), (0, hw_pad - hw))
        x2 = jnp.pad(x2, pad)
        m2 = jnp.pad(m2, pad)

    dtype_bytes = jnp.dtype(x.dtype).itemsize
    sub = 16 if dtype_bytes == 2 else 8  # sublane packing multiple

    # Size row_tile so one block is ~2 MiB: with 2 inputs + 1 output, each
    # double-buffered (~6 live buffers), this stays inside v5e's 16 MiB scoped
    # VMEM default and well under v7x's 64 MiB total.
    target_block_bytes = 2 * 1024 * 1024
    row_tile = (target_block_bytes // (hw_pad * dtype_bytes)) // sub * sub
    row_tile = max(sub, row_tile)
    row_tile = min(row_tile, ((rows + sub - 1) // sub) * sub)

    block_bytes = row_tile * hw_pad * dtype_bytes
    compiler_kwargs = dict(dimension_semantics=("parallel",))
    vmem_needed = 6 * block_bytes
    if vmem_needed > 12 * 1024 * 1024:
        # Only happens for huge H*W where even row_tile == sub overshoots.
        # TODO(synk): for extremely large H*W, split the reduction over a
        # second "arbitrary" HW grid axis with partial-sum accumulators
        # instead of raising the VMEM limit.
        compiler_kwargs["vmem_limit_bytes"] = min(
            int(vmem_needed * 1.25) + (1 << 20), 100 * 1024 * 1024
        )

    kernel = functools.partial(
        _adain_kernel,
        eps=float(eps),
        unbiased=bool(unbiased),
        alpha=float(alpha),
        hw_valid=hw,
    )

    cost = pl.CostEstimate(
        flops=10 * rows * hw,
        transcendentals=2 * rows,
        bytes_accessed=3 * rows * hw * dtype_bytes,
    )

    out2 = pl.pallas_call(
        kernel,
        out_shape=jax.ShapeDtypeStruct((rows, hw_pad), x.dtype),
        grid_spec=pltpu.PrefetchScalarGridSpec(
            num_scalar_prefetch=0,
            grid=(pl.cdiv(rows, row_tile),),
            in_specs=[
                pl.BlockSpec((row_tile, hw_pad), lambda i: (i, 0)),
                pl.BlockSpec((row_tile, hw_pad), lambda i: (i, 0)),
            ],
            out_specs=pl.BlockSpec((row_tile, hw_pad), lambda i: (i, 0)),
        ),
        compiler_params=pltpu.CompilerParams(**compiler_kwargs),
        cost_estimate=cost,
    )(x2, m2)

    if hw_pad != hw:
        out2 = out2[:, :hw]
    return out2.reshape(n, c, h, w)


def _reference(x, m, eps=1e-9, unbiased=True, alpha=1.0):
    ddof = 1 if unbiased else 0
    axes = (2, 3)
    mu_c = jnp.mean(x, axis=axes, keepdims=True)
    var_c = jnp.var(x, axis=axes, keepdims=True, ddof=ddof)
    x_hat = (x - mu_c) / jnp.sqrt(var_c + eps)
    mu_s = jnp.mean(m, axis=axes, keepdims=True)
    var_s = jnp.var(m, axis=axes, keepdims=True, ddof=ddof)
    gamma = jnp.sqrt(var_s + eps)
    out = x_hat * gamma + mu_s
    if alpha != 1.0:
        out = alpha * out + (1.0 - alpha) * x
    return out


if __name__ == "__main__":
    key = jax.random.PRNGKey(0)
    kx, km = jax.random.split(key)
    N, C, H, W = 2, 4, 16, 16
    x = jax.random.normal(kx, (N, C, H, W), dtype=jnp.float32)
    modulation = 0.5 + 2.0 * jax.random.normal(km, (N, C, H, W), dtype=jnp.float32)

    out = adaptive_norm(x, modulation, eps=1e-9, unbiased=True, alpha=1.0)
    out = jax.block_until_ready(out)

    ref = _reference(x, modulation)
    assert out.shape == (N, C, H, W)
    assert jnp.allclose(out, ref, atol=1e-4, rtol=1e-4), "mismatch vs reference"

    # Exercise the alpha-blend path and a non-128-multiple spatial size
    # (hits the lane-padding/masking path) on a second small shape.
    x3 = jax.random.normal(kx, (2, 4, 10, 10), dtype=jnp.float32)
    m3 = 1.5 * jax.random.normal(km, (2, 4, 10, 10), dtype=jnp.float32) - 0.25
    out3 = jax.block_until_ready(adaptive_norm(x3, m3, alpha=0.7))
    ref3 = _reference(x3, m3, alpha=0.7)
    assert jnp.allclose(out3, ref3, atol=1e-4, rtol=1e-4), "mismatch (padded/alpha)"

    print("KERNEL_OK")
</pallas_src>

<mosaic_0001>
module attributes {stable_mosaic.version = 11 : i64} {
  func.func @_adain_kernel(%arg0: i32, %arg1: memref<8x256xf32, #tpu.memory_space<vmem>>, %arg2: memref<8x256xf32, #tpu.memory_space<vmem>>, %arg3: memref<8x256xf32, #tpu.memory_space<vmem>>) attributes {dimension_semantics = [#tpu.dimension_semantics<parallel>], iteration_bounds = array<i64: 1>, scalar_prefetch = 0 : i64, scratch_operands = 0 : i64, tpu.core_type = #tpu.core_type<tc>, window_params = [{transform_indices = @transform_0, window_bounds = array<i64: 8, 256>}, {transform_indices = @transform_1, window_bounds = array<i64: 8, 256>}, {transform_indices = @transform_2, window_bounds = array<i64: 8, 256>}]} {
    %c0 = arith.constant 0 : index
    %c0_0 = arith.constant 0 : index
    %0 = vector.load %arg1[%c0, %c0_0] : memref<8x256xf32, #tpu.memory_space<vmem>>, vector<8x256xf32>
    %c0_1 = arith.constant 0 : index
    %c0_2 = arith.constant 0 : index
    %1 = vector.load %arg2[%c0_1, %c0_2] : memref<8x256xf32, #tpu.memory_space<vmem>>, vector<8x256xf32>
    %cst = arith.constant dense<0.000000e+00> : vector<8xf32>
    %2 = vector.multi_reduction <add>, %1, %cst [1] : vector<8x256xf32> to vector<8xf32>
    %3 = vector.shape_cast %2 : vector<8xf32> to vector<8x1xf32>
    %cst_3 = arith.constant 3.906250e-03 : f32
    %4 = vector.broadcast %cst_3 : f32 to vector<8x1xf32>
    %5 = arith.mulf %3, %4 : vector<8x1xf32>
    %6 = vector.broadcast %5 : vector<8x1xf32> to vector<8x256xf32>
    %7 = arith.subf %1, %6 : vector<8x256xf32>
    %8 = arith.mulf %7, %7 : vector<8x256xf32>
    %cst_4 = arith.constant dense<0.000000e+00> : vector<8xf32>
    %9 = vector.multi_reduction <add>, %8, %cst_4 [1] : vector<8x256xf32> to vector<8xf32>
    %10 = vector.shape_cast %9 : vector<8xf32> to vector<8x1xf32>
    %cst_5 = arith.constant 0.00392156886 : f32
    %11 = vector.broadcast %cst_5 : f32 to vector<8x1xf32>
    %12 = arith.mulf %10, %11 : vector<8x1xf32>
    %cst_6 = arith.constant 9.99999971E-10 : f32
    %13 = vector.broadcast %cst_6 : f32 to vector<8x1xf32>
    %14 = arith.addf %12, %13 : vector<8x1xf32>
    %15 = math.sqrt %14 : vector<8x1xf32>
    %cst_7 = arith.constant dense<0.000000e+00> : vector<8xf32>
    %16 = vector.multi_reduction <add>, %0, %cst_7 [1] : vector<8x256xf32> to vector<8xf32>
    %17 = vector.shape_cast %16 : vector<8xf32> to vector<8x1xf32>
    %cst_8 = arith.constant 3.906250e-03 : f32
    %18 = vector.broadcast %cst_8 : f32 to vector<8x1xf32>
    %19 = arith.mulf %17, %18 : vector<8x1xf32>
    %20 = vector.broadcast %19 : vector<8x1xf32> to vector<8x256xf32>
    %21 = arith.subf %0, %20 : vector<8x256xf32>
    %22 = arith.mulf %21, %21 : vector<8x256xf32>
    %cst_9 = arith.constant dense<0.000000e+00> : vector<8xf32>
    %23 = vector.multi_reduction <add>, %22, %cst_9 [1] : vector<8x256xf32> to vector<8xf32>
    %24 = vector.shape_cast %23 : vector<8xf32> to vector<8x1xf32>
    %cst_10 = arith.constant 0.00392156886 : f32
    %25 = vector.broadcast %cst_10 : f32 to vector<8x1xf32>
    %26 = arith.mulf %24, %25 : vector<8x1xf32>
    %cst_11 = arith.constant 9.99999971E-10 : f32
    %27 = vector.broadcast %cst_11 : f32 to vector<8x1xf32>
    %28 = arith.addf %26, %27 : vector<8x1xf32>
    %29 = math.rsqrt %28 : vector<8x1xf32>
    %30 = arith.mulf %15, %29 : vector<8x1xf32>
    %31 = vector.broadcast %30 : vector<8x1xf32> to vector<8x256xf32>
    %32 = arith.mulf %21, %31 : vector<8x256xf32>
    %33 = vector.broadcast %5 : vector<8x1xf32> to vector<8x256xf32>
    %34 = arith.addf %32, %33 : vector<8x256xf32>
    %c0_12 = arith.constant 0 : index
    %c0_13 = arith.constant 0 : index
    %35 = vector.load %arg3[%c0_12, %c0_13] : memref<8x256xf32, #tpu.memory_space<vmem>>, vector<8x256xf32>
    tpu.vector_store %arg3[%c0_12, %c0_13], %34 {strides = array<i32>} : memref<8x256xf32, #tpu.memory_space<vmem>>, vector<8x256xf32>,
    return
  }
  func.func @transform_0(%arg0: i32) -> (i32, i32) {
    %c0_i32 = arith.constant 0 : i32
    %c0_i32_0 = arith.constant 0 : i32
    return %arg0, %c0_i32 : i32, i32
  }
  func.func @transform_1(%arg0: i32) -> (i32, i32) {
    %c0_i32 = arith.constant 0 : i32
    %c0_i32_0 = arith.constant 0 : i32
    return %arg0, %c0_i32 : i32, i32
  }
  func.func @transform_2(%arg0: i32) -> (i32, i32) {
    %c0_i32 = arith.constant 0 : i32
    %c0_i32_0 = arith.constant 0 : i32
    return %arg0, %c0_i32 : i32, i32
  }
}

</mosaic_0001>

<llo_original>
// kernel: tpu_custom_call.1
$region0: #{tpu_custom_call.1}
  #allocation0 [shape = 'u32[]', space=smem, size = 0x4, offset = 0x4, fixed_abs, tag = 'smem constant byte address 0x4 - core index']
  #allocation1 [shape = 'u32[144,128]{1,0:T(1,128)}', space=vmem, size = 0x12000, scoped, tag = 'internal scratch']
  %s0 = inlined_call_operand.hbm [shape: f32[8,256], index: 0, kind: input, shape index: {}]
  %s1 = inlined_call_operand.hbm [shape: f32[8,256], index: 1, kind: input, shape index: {}]
  %s2 = inlined_call_operand.hbm [shape: f32[8,256], index: 2, kind: output, shape index: {}]
  %s3 = sld [smem:[#allocation0]]
  $region26: #{tpu_custom_call.1} parent=0
    _
  %s5 = ssub.s32 1, %s3
  %s6 = scalar_select 0, %s5, %s3
  $region1: #{tpu_custom_call.1} parent=0
    #allocation2 [shape = 'u8[8192]{0}', space=vmem, size = 0x2000, scoped, tag = 'input window, operand 0, single buffered']
    #allocation3 [shape = 's32[1]{0}', space=sflag, size = 0x4, scoped, tag = 'scoped memory for tpu_custom_call.1']
    #allocation4 [shape = 's32[1]{0}', space=sflag, size = 0x4, scoped, tag = 'scoped memory for tpu_custom_call.1']
    #allocation5 [shape = 'u8[8192]{0}', space=vmem, size = 0x2000, scoped, tag = 'input window, operand 1, single buffered']
    #allocation6 [shape = 's32[1]{0}', space=sflag, size = 0x4, scoped, tag = 'scoped memory for tpu_custom_call.1']
    #allocation7 [shape = 'u8[8192]{0}', space=vmem, size = 0x2000, scoped, tag = 'output window, operand 0, single buffered']
    %7 = vsyncpa [#allocation3], 0
    %8 = vsyncpa [#allocation6], 0
    %9 = vsyncpa [#allocation4], 0
    // Predicated region
    $region2: #{tpu_custom_call.1} parent=1 // pred_check
      _
    $region3: #{tpu_custom_call.1} parent=1 // pred_check_branch
      %11 = sbr.rel (0) target = $region5
    $region4: #{tpu_custom_call.1} parent=1 // pred_region
      %s13 = ssub.s32 256, 256
      %14 = vsyncadd [#allocation3], %s13
      %s16 = sshll.u32 [#allocation2], 4
      %s17 = int_to_ptr.vmem [resolvable:$true] %s16
      %19 = dma.hbm_to_vmem [thread:$0]  %s0, 256, %s17, [#allocation3]
    $region5: #{tpu_custom_call.1} parent=1 // pred_fallthru
      _
    // Predicated region
    $region6: #{tpu_custom_call.1} parent=1 // pred_check
      _
    $region7: #{tpu_custom_call.1} parent=1 // pred_check_branch
      %21 = sbr.rel (0) target = $region9
    $region8: #{tpu_custom_call.1} parent=1 // pred_region
      %s23 = ssub.s32 256, 256
      %24 = vsyncadd [#allocation6], %s23
      %s26 = sshll.u32 [#allocation5], 4
      %s27 = int_to_ptr.vmem [resolvable:$true] %s26
      %29 = dma.hbm_to_vmem [thread:$0]  %s1, 256, %s27, [#allocation6]
    $region9: #{tpu_custom_call.1} parent=1 // pred_fallthru
      _
    // Predicated region
    $region10: #{tpu_custom_call.1} parent=1 // pred_check
      _
    $region11: #{tpu_custom_call.1} parent=1 // pred_check_branch
      %31 = sbr.rel (0) target = $region13
    $region12: #{tpu_custom_call.1} parent=1 // pred_region
      %32 = dma.done [#allocation3], 256
    $region13: #{tpu_custom_call.1} parent=1 // pred_fallthru
      _
    // Predicated region
    $region14: #{tpu_custom_call.1} parent=1 // pred_check
      _
    $region15: #{tpu_custom_call.1} parent=1 // pred_check_branch
      %34 = sbr.rel (0) target = $region17
    $region16: #{tpu_custom_call.1} parent=1 // pred_region
      %35 = dma.done [#allocation6], 256
    $region17: #{tpu_custom_call.1} parent=1 // pred_fallthru
      _
    %v36 = vld [vmem:[#allocation2] sm:$0xff]
    %v37 = vld [vmem:[#allocation2 + $0x8] sm:$0xff]
    %v38 = vld [vmem:[#allocation5] sm:$0xff]
    %v39 = vld [vmem:[#allocation5 + $0x8] sm:$0xff]
    %v40 = vadd.f32 %v38, %v39
    %41 = vadd.xlane.f32.xlu0 %v40
    %v42 = vpop.xlane.xlu0 %41
    %v43 = vmul.f32 %v42, 0.00390625
    %v44 = vsub.f32 %v38, %v43
    %v45 = vsub.f32 %v39, %v43
    %v46 = vmul.f32 %v44, %v44
    %v47 = vmul.f32 %v45, %v45
    %v48 = vadd.f32 %v46, %v47
    %49 = vadd.xlane.f32.xlu0 %v48
    %v50 = vpop.xlane.xlu0 %49
    %v51 = vmul.f32 %v50, 0.003921569
    %v52 = vadd.f32 %v51, 1e-09
    %v53 = vrsqrt.pop %v52
    %v54 = vmul.f32 %v52, %v53
    %vm55 = vcmp.eq.f32.partialorder %v52, inf
    %v56 = vsel %vm55, %v52, %v54
    %vm57 = vcmp.eq.f32.partialorder %v52, 0.0
    %v58 = vand.u32 %v52, 2147483648
    %v59 = vsel %vm57, %v58, %v56
    %v60 = vadd.f32 %v36, %v37
    %61 = vadd.xlane.f32.xlu0 %v60
    %v62 = vpop.xlane.xlu0 %61
    %v63 = vmul.f32 %v62, 0.00390625
    %v64 = vsub.f32 %v36, %v63
    %v65 = vsub.f32 %v37, %v63
    %v66 = vmul.f32 %v64, %v64
    %v67 = vmul.f32 %v65, %v65
    %v68 = vadd.f32 %v66, %v67
    %69 = vadd.xlane.f32.xlu0 %v68
    %v70 = vpop.xlane.xlu0 %69
    %v71 = vmul.f32 %v70, 0.003921569
    %v72 = vadd.f32 %v71, 1e-09
    %v73 = vrsqrt.pop %v72
    %v74 = vmul.f32 %v59, %v73
    %v75 = vmul.f32 %v64, %v74
    %v76 = vmul.f32 %v65, %v74
    %v77 = vadd.f32 %v75, %v43
    %v78 = vadd.f32 %v76, %v43
    %79 = vst [vmem:[#allocation7] sm:$0xff] %v77
    %80 = vst [vmem:[#allocation7 + $0x8] sm:$0xff] %v78
    // Predicated region
    $region18: #{tpu_custom_call.1} parent=1 // pred_check
      _
    $region19: #{tpu_custom_call.1} parent=1 // pred_check_branch
      %82 = sbr.rel (0) target = $region21
    $region20: #{tpu_custom_call.1} parent=1 // pred_region
      %s84 = ssub.s32 256, 256
      %85 = vsyncadd [#allocation4], %s84
      %s87 = sshll.u32 [#allocation7], 4
      %s88 = int_to_ptr.vmem [resolvable:$true] %s87
      %90 = dma.vmem_to_hbm [thread:$0]  %s88, 256, %s2, [#allocation4]
    $region21: #{tpu_custom_call.1} parent=1 // pred_fallthru
      _
    // Predicated region
    $region22: #{tpu_custom_call.1} parent=1 // pred_check
      _
    $region23: #{tpu_custom_call.1} parent=1 // pred_check_branch
      %92 = sbr.rel (0) target = $region25
    $region24: #{tpu_custom_call.1} parent=1 // pred_region
      %93 = dma.done [#allocation4], 256
    $region25: #{tpu_custom_call.1} parent=1 // pred_fallthru
      _
    %94 = vsyncpa [#allocation3], 1
    %95 = vsyncpa [#allocation6], 1
    %96 = vsyncpa [#allocation4], 1

</llo_original>
